<compile_context>
chip_gen: v7x
topology: tpu7x:2x2x1
jax: 0.10.0
libtpu: 0.0.40
codegen_flags: <defaults>
</compile_context>

<pallas_src>
import functools

import jax
import jax.numpy as jnp
from jax.experimental import pallas as pl
from jax.experimental.pallas import tpu as pltpu


def _round_up(x: int, m: int) -> int:
    return (x + m - 1) // m * m


def _tpu_vmem_capacity_bytes() -> int:
    try:
        return int(pltpu.get_tpu_info().vmem_capacity_bytes)
    except Exception:
        return 128 << 20  # v5e/v6e default


# --------------------------------------------------------------------------
# Kernel: whole MLP on one row tile of x.
# refs = (x_ref, w_0, b_0, w_1, ..., w_{L-1}, o_ref)
#   w_0: (Kp0, Np0) compute_dtype, b_0: (1, Np0) f32 (carries ones-column seed)
#   w_i (i>0): (Np_{i-1}, Np_i) compute_dtype with bias folded into the K row
#              at index c_out_{i-1}; non-last layers also carry a 1 at
#              [c_out_{i-1}, c_out_i] to propagate the ones column.
# --------------------------------------------------------------------------
def _fused_mlp_kernel(*refs, n_layers: int):
    x_ref = refs[0]
    w0_ref = refs[1]
    b0_ref = refs[2]
    w_refs = refs[3:3 + (n_layers - 1)]
    o_ref = refs[-1]
    compute_dtype = x_ref.dtype

    # Layer 0: explicit bias-add (also seeds the ones column for layer 1).
    y = jnp.dot(x_ref[...], w0_ref[...], preferred_element_type=jnp.float32)
    y = y + b0_ref[...]

    # Layers 1..L-1: bias folded into the weight -> epilogue is ReLU + cast.
    for li in range(1, n_layers):
        y = jnp.maximum(y, 0.0).astype(compute_dtype)   # ReLU; Dropout(0)==id
        y = jnp.dot(y, w_refs[li - 1][...], preferred_element_type=jnp.float32)

    o_ref[...] = y.astype(o_ref.dtype)


# --------------------------------------------------------------------------
# One-time parameter prep: transpose to (C_in, C_out), pad to lane-dense dims,
# fold biases of layers 1..L-1 into the padded K rows of their weights.
# --------------------------------------------------------------------------
def prepare_mlp_params(params, compute_dtype=jnp.bfloat16):
    """params: list of (w (C_out, C_in), b (C_out,)) in torch layout."""
    L = len(params)
    c_ins = [int(w.shape[1]) for w, _ in params]
    c_outs = [int(w.shape[0]) for w, _ in params]
    # Non-last layers reserve one extra (padded) output lane for the ones column.
    nps = [_round_up(c_outs[i] + (1 if i < L - 1 else 0), 128) for i in range(L)]
    kps = [_round_up(c_ins[0], 128)] + nps[:-1]

    weights = []
    for i in range(L):
        w, b = params[i]
        w_p = jnp.zeros((kps[i], nps[i]), compute_dtype)
        w_p = w_p.at[:c_ins[i], :c_outs[i]].set(
            jnp.transpose(w).astype(compute_dtype))
        if i > 0:
            bias_row = c_outs[i - 1]                       # ones-column index
            w_p = w_p.at[bias_row, :c_outs[i]].set(b.astype(compute_dtype))
            if i < L - 1:                                  # propagate ones col
                w_p = w_p.at[bias_row, c_outs[i]].set(
                    jnp.asarray(1.0, compute_dtype))
        weights.append(w_p)

    b0_p = jnp.zeros((1, nps[0]), jnp.float32)
    b0_p = b0_p.at[0, :c_outs[0]].set(params[0][1].astype(jnp.float32))
    if L > 1:
        b0_p = b0_p.at[0, c_outs[0]].set(1.0)              # seed ones column

    return {
        "weights": weights,
        "bias0": b0_p,
        "c_out_last": c_outs[-1],
        "compute_dtype": jnp.dtype(compute_dtype),
    }


# --------------------------------------------------------------------------
# Fused forward pass.
# --------------------------------------------------------------------------
def mlp_forward(x, prepped, *, tm=None):
    M, C = x.shape
    weights = prepped["weights"]
    b0_p = prepped["bias0"]
    n_layers = len(weights)
    compute_dtype = prepped["compute_dtype"]
    itemsize = compute_dtype.itemsize
    out_dtype = x.dtype
    out_itemsize = jnp.dtype(out_dtype).itemsize
    c_out_last = prepped["c_out_last"]

    kp0 = int(weights[0].shape[0])            # padded input features
    n_last_pad = int(weights[-1].shape[1])    # padded output features
    max_np = max(int(w.shape[1]) for w in weights)

    # Generation-aware VMEM budget (128 MiB on v5e/v6e, 64 MiB/TC on v7x).
    vmem_capacity = _tpu_vmem_capacity_bytes()
    is_v7x_like = vmem_capacity <= (64 << 20)
    vmem_budget = max(16 << 20,
                      min(int(vmem_capacity * 0.85), vmem_capacity - (12 << 20)))

    w_resident = sum(int(w.size) * itemsize for w in weights) + int(b0_p.size) * 4
    headroom = 6 << 20
    per_row = (2 * kp0 * itemsize            # double-buffered x tile
               + 2 * n_last_pad * out_itemsize  # double-buffered out tile
               + 2 * max_np * 4)             # live f32 intermediates

    # Row tile from whatever VMEM is left after the resident weights.
    row_align = {4: 8, 2: 16, 1: 32}[itemsize]
    if tm is None:
        avail = vmem_budget - w_resident - headroom
        if avail > per_row * row_align:
            tm = min(1024, (avail // per_row) // row_align * row_align)
        else:
            tm = row_align
        if tm >= 256:
            tm = (tm // 256) * 256            # v6e/v7x MXU is natively 256-wide
    tm = max(row_align, min(_round_up(int(tm), row_align), _round_up(M, row_align)))
    m_pad = _round_up(M, tm)

    # v7x has 2 TensorCores per chip: make sure the parallel axis has >=2 steps.
    if is_v7x_like and m_pad // tm == 1 and M > row_align:
        tm = max(row_align, _round_up((M + 1) // 2, row_align))
        m_pad = _round_up(M, tm)

    # Pad / cast x only when needed (skip the extra HBM pass when aligned).
    if m_pad == M and kp0 == C and x.dtype == compute_dtype:
        x_p = x
    else:
        x_p = jnp.zeros((m_pad, kp0), compute_dtype)
        x_p = x_p.at[:M, :C].set(x.astype(compute_dtype))

    flat_args = [x_p, weights[0], b0_p] + list(weights[1:])
    kernel = functools.partial(_fused_mlp_kernel, n_layers=n_layers)

    def run(single_buffer_weights: bool):
        wkw = ({"pipeline_mode": pl.Buffered(1)}
               if single_buffer_weights else {})
        in_specs = [pl.BlockSpec((tm, kp0), lambda i: (i, 0))]
        # Grid-invariant weights/biases: constant index_map -> fetched once.
        in_specs.append(pl.BlockSpec(tuple(weights[0].shape),
                                     lambda i: (0, 0), **wkw))
        in_specs.append(pl.BlockSpec((1, int(b0_p.shape[1])),
                                     lambda i: (0, 0), **wkw))
        for w_p in weights[1:]:
            in_specs.append(pl.BlockSpec(tuple(w_p.shape),
                                         lambda i: (0, 0), **wkw))
        out_spec = pl.BlockSpec((tm, n_last_pad), lambda i: (i, 0))

        wbuf = 1 if single_buffer_weights else 2
        est = (wbuf * w_resident
               + 2 * tm * kp0 * itemsize
               + 2 * tm * n_last_pad * out_itemsize
               + 2 * tm * max_np * 4
               + headroom)
        vmem_limit = int(max(16 << 20, min(vmem_budget, est)))

        return pl.pallas_call(
            kernel,
            out_shape=jax.ShapeDtypeStruct((m_pad, n_last_pad), out_dtype),
            grid_spec=pltpu.PrefetchScalarGridSpec(
                num_scalar_prefetch=0,
                grid=(m_pad // tm,),
                in_specs=in_specs,
                out_specs=out_spec,
            ),
            compiler_params=pltpu.CompilerParams(
                dimension_semantics=("parallel",),
                vmem_limit_bytes=vmem_limit,
            ),
        )(*flat_args)

    try:
        out_padded = run(True)       # single-buffered resident weights
    except Exception:
        out_padded = run(False)      # conservative fallback (default buffering)

    return out_padded[:M, :c_out_last]


# --------------------------------------------------------------------------
# Parameter init matching torch.nn.Linear (U(-1/sqrt(fan_in), +1/sqrt(fan_in))).
# --------------------------------------------------------------------------
def init_mlp_params(key, channels, dtype=jnp.float32):
    params = []
    for i in range(1, len(channels)):
        fan_in, fan_out = channels[i - 1], channels[i]
        key, kw, kb = jax.random.split(key, 3)
        bound = 1.0 / (fan_in ** 0.5)
        w = jax.random.uniform(kw, (fan_out, fan_in), dtype, -bound, bound)
        b = jax.random.uniform(kb, (fan_out,), dtype, -bound, bound)
        params.append((w, b))
    return params


def mlp_reference(x, params):
    """Pure-JAX reference (torch-layout params)."""
    n_layers = len(params)
    for li, (w, b) in enumerate(params):
        x = x @ w.T + b
        if li != n_layers - 1:
            x = jnp.maximum(x, 0.0)
    return x


if __name__ == "__main__":
    # MLP([32, 64, 16]) -> Linear(32,64) + ReLU + Dropout(0.0), Linear(64,16)
    channels = [32, 64, 16]
    batch = 16

    key = jax.random.PRNGKey(0)
    key, kx = jax.random.split(key)
    x = jax.random.normal(kx, (batch, channels[0]), jnp.float32)
    params = init_mlp_params(key, channels)

    ref = mlp_reference(x, params)

    # f32 compute path.
    out_f32 = mlp_forward(x, prepare_mlp_params(params, compute_dtype=jnp.float32))
    out_f32 = jax.block_until_ready(out_f32)
    assert out_f32.shape == (batch, channels[-1]), out_f32.shape
    assert jnp.allclose(out_f32, ref, atol=1e-2, rtol=1e-2), "f32 mismatch vs reference"

    # Default bf16 compute path (f32 accumulation) -- looser tolerance.
    out_bf16 = mlp_forward(x, prepare_mlp_params(params))
    out_bf16 = jax.block_until_ready(out_bf16)
    assert out_bf16.shape == (batch, channels[-1]), out_bf16.shape
    assert jnp.allclose(out_bf16, ref, atol=1e-1, rtol=1e-1), "bf16 mismatch vs reference"

    print("KERNEL_OK")
</pallas_src>

<mosaic_0001>
module attributes {stable_mosaic.version = 11 : i64} {
  func.func @_fused_mlp_kernel(%arg0: i32, %arg1: memref<16x128xf32, #tpu.memory_space<vmem>>, %arg2: memref<128x128xf32, #tpu.memory_space<vmem>>, %arg3: memref<1x128xf32, #tpu.memory_space<vmem>>, %arg4: memref<128x128xf32, #tpu.memory_space<vmem>>, %arg5: memref<16x128xf32, #tpu.memory_space<vmem>>) attributes {dimension_semantics = [#tpu.dimension_semantics<parallel>], iteration_bounds = array<i64: 1>, scalar_prefetch = 0 : i64, scratch_operands = 0 : i64, tpu.core_type = #tpu.core_type<tc>, window_params = [{transform_indices = @transform_0, window_bounds = array<i64: 16, 128>}, {pipeline_mode = #tpu.pipeline_mode<synchronous>, transform_indices = @transform_1, window_bounds = array<i64: 128, 128>}, {pipeline_mode = #tpu.pipeline_mode<synchronous>, transform_indices = @transform_2, window_bounds = array<i64: 1, 128>}, {pipeline_mode = #tpu.pipeline_mode<synchronous>, transform_indices = @transform_3, window_bounds = array<i64: 128, 128>}, {transform_indices = @transform_4, window_bounds = array<i64: 16, 128>}]} {
    %c0 = arith.constant 0 : index
    %c0_0 = arith.constant 0 : index
    %0 = vector.load %arg1[%c0, %c0_0] : memref<16x128xf32, #tpu.memory_space<vmem>>, vector<16x128xf32>
    %c0_1 = arith.constant 0 : index
    %c0_2 = arith.constant 0 : index
    %1 = vector.load %arg2[%c0_1, %c0_2] : memref<128x128xf32, #tpu.memory_space<vmem>>, vector<128x128xf32>
    %cst = arith.constant dense<0.000000e+00> : vector<16x128xf32>
    %2 = tpu.matmul %0, %1, %cst {dimension_numbers = #tpu.dot_dimension_numbers<[1], [0], [0], [1], [0, 0, 1, 1], [], []>} : vector<16x128xf32>, vector<128x128xf32>, vector<16x128xf32> -> vector<16x128xf32>
    %c0_3 = arith.constant 0 : index
    %c0_4 = arith.constant 0 : index
    %3 = vector.load %arg3[%c0_3, %c0_4] : memref<1x128xf32, #tpu.memory_space<vmem>>, vector<1x128xf32>
    %4 = vector.broadcast %3 : vector<1x128xf32> to vector<16x128xf32>
    %5 = arith.addf %2, %4 : vector<16x128xf32>
    %cst_5 = arith.constant 0.000000e+00 : f32
    %6 = vector.broadcast %cst_5 : f32 to vector<16x128xf32>
    %7 = arith.maximumf %5, %6 : vector<16x128xf32>
    %c0_6 = arith.constant 0 : index
    %c0_7 = arith.constant 0 : index
    %8 = vector.load %arg4[%c0_6, %c0_7] : memref<128x128xf32, #tpu.memory_space<vmem>>, vector<128x128xf32>
    %cst_8 = arith.constant dense<0.000000e+00> : vector<16x128xf32>
    %9 = tpu.matmul %7, %8, %cst_8 {dimension_numbers = #tpu.dot_dimension_numbers<[1], [0], [0], [1], [0, 0, 1, 1], [], []>} : vector<16x128xf32>, vector<128x128xf32>, vector<16x128xf32> -> vector<16x128xf32>
    %c0_9 = arith.constant 0 : index
    %c0_10 = arith.constant 0 : index
    %10 = vector.load %arg5[%c0_9, %c0_10] : memref<16x128xf32, #tpu.memory_space<vmem>>, vector<16x128xf32>
    tpu.vector_store %arg5[%c0_9, %c0_10], %9 {strides = array<i32>} : memref<16x128xf32, #tpu.memory_space<vmem>>, vector<16x128xf32>,
    return
  }
  func.func @transform_0(%arg0: i32) -> (i32, i32) {
    %c0_i32 = arith.constant 0 : i32
    %c0_i32_0 = arith.constant 0 : i32
    return %arg0, %c0_i32 : i32, i32
  }
  func.func @transform_1(%arg0: i32) -> (i32, i32) {
    %c0_i32 = arith.constant 0 : i32
    %c0_i32_0 = arith.constant 0 : i32
    %c0_i32_1 = arith.constant 0 : i32
    return %c0_i32, %c0_i32_0 : i32, i32
  }
  func.func @transform_2(%arg0: i32) -> (i32, i32) {
    %c0_i32 = arith.constant 0 : i32
    %c0_i32_0 = arith.constant 0 : i32
    %c0_i32_1 = arith.constant 0 : i32
    return %c0_i32, %c0_i32_0 : i32, i32
  }
  func.func @transform_3(%arg0: i32) -> (i32, i32) {
    %c0_i32 = arith.constant 0 : i32
    %c0_i32_0 = arith.constant 0 : i32
    %c0_i32_1 = arith.constant 0 : i32
    return %c0_i32, %c0_i32_0 : i32, i32
  }
  func.func @transform_4(%arg0: i32) -> (i32, i32) {
    %c0_i32 = arith.constant 0 : i32
    %c0_i32_0 = arith.constant 0 : i32
    return %arg0, %c0_i32 : i32, i32
  }
}

module attributes {stable_mosaic.version = 11 : i64} {
  func.func @_fused_mlp_kernel(%arg0: i32, %arg1: memref<16x128xf32, #tpu.memory_space<vmem>>, %arg2: memref<128x128xf32, #tpu.memory_space<vmem>>, %arg3: memref<1x128xf32, #tpu.memory_space<vmem>>, %arg4: memref<128x128xf32, #tpu.memory_space<vmem>>, %arg5: memref<16x128xf32, #tpu.memory_space<vmem>>) attributes {dimension_semantics = [#tpu.dimension_semantics<parallel>], iteration_bounds = array<i64: 1>, scalar_prefetch = 0 : i64, scratch_operands = 0 : i64, tpu.core_type = #tpu.core_type<tc>, window_params = [{transform_indices = @transform_0, window_bounds = array<i64: 16, 128>}, {pipeline_mode = #tpu.pipeline_mode<synchronous>, transform_indices = @transform_1, window_bounds = array<i64: 128, 128>}, {pipeline_mode = #tpu.pipeline_mode<synchronous>, transform_indices = @transform_2, window_bounds = array<i64: 1, 128>}, {pipeline_mode = #tpu.pipeline_mode<synchronous>, transform_indices = @transform_3, window_bounds = array<i64: 128, 128>}, {transform_indices = @transform_4, window_bounds = array<i64: 16, 128>}]} {
    %c0 = arith.constant 0 : index
    %c0_0 = arith.constant 0 : index
    %0 = vector.load %arg1[%c0, %c0_0] : memref<16x128xf32, #tpu.memory_space<vmem>>, vector<16x128xf32>
    %c0_1 = arith.constant 0 : index
    %c0_2 = arith.constant 0 : index
    %1 = vector.load %arg2[%c0_1, %c0_2] : memref<128x128xf32, #tpu.memory_space<vmem>>, vector<128x128xf32>
    %cst = arith.constant dense<0.000000e+00> : vector<16x128xf32>
    %2 = tpu.matmul %0, %1, %cst {dimension_numbers = #tpu.dot_dimension_numbers<[1], [0], [0], [1], [0, 0, 1, 1], [], []>} : vector<16x128xf32>, vector<128x128xf32>, vector<16x128xf32> -> vector<16x128xf32>
    %c0_3 = arith.constant 0 : index
    %c0_4 = arith.constant 0 : index
    %3 = vector.load %arg3[%c0_3, %c0_4] : memref<1x128xf32, #tpu.memory_space<vmem>>, vector<1x128xf32>
    %4 = vector.broadcast %3 : vector<1x128xf32> to vector<16x128xf32>
    %5 = arith.addf %2, %4 : vector<16x128xf32>
    %cst_5 = arith.constant 0.000000e+00 : f32
    %6 = vector.broadcast %cst_5 : f32 to vector<16x128xf32>
    %7 = arith.maximumf %5, %6 : vector<16x128xf32>
    %c0_6 = arith.constant 0 : index
    %c0_7 = arith.constant 0 : index
    %8 = vector.load %arg4[%c0_6, %c0_7] : memref<128x128xf32, #tpu.memory_space<vmem>>, vector<128x128xf32>
    %cst_8 = arith.constant dense<0.000000e+00> : vector<16x128xf32>
    %9 = tpu.matmul %7, %8, %cst_8 {dimension_numbers = #tpu.dot_dimension_numbers<[1], [0], [0], [1], [0, 0, 1, 1], [], []>} : vector<16x128xf32>, vector<128x128xf32>, vector<16x128xf32> -> vector<16x128xf32>
    %c0_9 = arith.constant 0 : index
    %c0_10 = arith.constant 0 : index
    %10 = vector.load %arg5[%c0_9, %c0_10] : memref<16x128xf32, #tpu.memory_space<vmem>>, vector<16x128xf32>
    tpu.vector_store %arg5[%c0_9, %c0_10], %9 {strides = array<i32>} : memref<16x128xf32, #tpu.memory_space<vmem>>, vector<16x128xf32>,
    return
  }
  func.func @transform_0(%arg0: i32) -> (i32, i32) {
    %c0_i32 = arith.constant 0 : i32
    %c0_i32_0 = arith.constant 0 : i32
    return %arg0, %c0_i32 : i32, i32
  }
  func.func @transform_1(%arg0: i32) -> (i32, i32) {
    %c0_i32 = arith.constant 0 : i32
    %c0_i32_0 = arith.constant 0 : i32
    %c0_i32_1 = arith.constant 0 : i32
    return %c0_i32, %c0_i32_0 : i32, i32
  }
  func.func @transform_2(%arg0: i32) -> (i32, i32) {
    %c0_i32 = arith.constant 0 : i32
    %c0_i32_0 = arith.constant 0 : i32
    %c0_i32_1 = arith.constant 0 : i32
    return %c0_i32, %c0_i32_0 : i32, i32
  }
  func.func @transform_3(%arg0: i32) -> (i32, i32) {
    %c0_i32 = arith.constant 0 : i32
    %c0_i32_0 = arith.constant 0 : i32
    %c0_i32_1 = arith.constant 0 : i32
    return %c0_i32, %c0_i32_0 : i32, i32
  }
  func.func @transform_4(%arg0: i32) -> (i32, i32) {
    %c0_i32 = arith.constant 0 : i32
    %c0_i32_0 = arith.constant 0 : i32
    return %arg0, %c0_i32 : i32, i32
  }
}

</mosaic_0001>

<llo_original>
// kernel: tpu_custom_call.1
$region0: #{tpu_custom_call.1}
  #allocation0 [shape = 'u32[]', space=smem, size = 0x4, offset = 0x4, fixed_abs, tag = 'smem constant byte address 0x4 - core index']
  #allocation1 [shape = 'u32[144,128]{1,0:T(1,128)}', space=vmem, size = 0x12000, scoped, tag = 'internal scratch']
  %s0 = inlined_call_operand.hbm [shape: f32[16,128], index: 0, kind: input, shape index: {}]
  %s1 = inlined_call_operand.hbm [shape: f32[128,128], index: 1, kind: input, shape index: {}]
  %s2 = inlined_call_operand.vmem [shape: f32[1,128], index: 2, kind: input, shape index: {}]
  %s3 = inlined_call_operand.hbm [shape: f32[128,128], index: 3, kind: input, shape index: {}]
  %s4 = inlined_call_operand.hbm [shape: f32[16,128], index: 4, kind: output, shape index: {}]
  %s5 = sld [smem:[#allocation0]]
  $region38: #{tpu_custom_call.1} parent=0
    _
  %s7 = ssub.s32 1, %s5
  %s8 = scalar_select 0, %s7, %s5
  $region1: #{tpu_custom_call.1} parent=0
    #allocation2 [shape = 'u8[8192]{0}', space=vmem, size = 0x2000, scoped, tag = 'input window, operand 0, single buffered']
    #allocation3 [shape = 's32[1]{0}', space=sflag, size = 0x4, scoped, tag = 'scoped memory for tpu_custom_call.1']
    #allocation4 [shape = 's32[1]{0}', space=sflag, size = 0x4, scoped, tag = 'scoped memory for tpu_custom_call.1']
    #allocation5 [shape = 'u8[65536]{0}', space=vmem, size = 0x10000, scoped, tag = 'input window, operand 1, single buffered']
    #allocation6 [shape = 's32[1]{0}', space=sflag, size = 0x4, scoped, tag = 'scoped memory for tpu_custom_call.1']
    #allocation7 [shape = 'u8[65536]{0}', space=vmem, size = 0x10000, scoped, tag = 'input window, operand 3, single buffered']
    #allocation8 [shape = 'u8[8192]{0}', space=vmem, size = 0x2000, scoped, tag = 'output window, operand 0, single buffered']
    %9 = vsyncpa [#allocation3], 0
    %10 = vsyncpa [#allocation6], 0
    %11 = vsyncpa [#allocation4], 0
    // Predicated region
    $region2: #{tpu_custom_call.1} parent=1 // pred_check
      _
    $region3: #{tpu_custom_call.1} parent=1 // pred_check_branch
      %13 = sbr.rel (0) target = $region5
    $region4: #{tpu_custom_call.1} parent=1 // pred_region
      %s15 = ssub.s32 256, 256
      %16 = vsyncadd [#allocation3], %s15
      %s17 = sshll.u32 [#allocation2], 4
      %s18 = int_to_ptr.vmem [resolvable:$true] %s17
      %23 = dma.hbm_to_vmem [thread:$0]  %s0, 256, %s18, [#allocation3], 128, 128, 8
    $region5: #{tpu_custom_call.1} parent=1 // pred_fallthru
      _
    // Predicated region
    $region6: #{tpu_custom_call.1} parent=1 // pred_check
      _
    $region7: #{tpu_custom_call.1} parent=1 // pred_check_branch
      %25 = sbr.rel (0) target = $region9
    $region8: #{tpu_custom_call.1} parent=1 // pred_region
      %s27 = ssub.s32 2048, 2048
      %28 = vsyncadd [#allocation6], %s27
      %s29 = sshll.u32 [#allocation5], 4
      %s30 = int_to_ptr.vmem [resolvable:$true] %s29
      %35 = dma.hbm_to_vmem [thread:$0]  %s1, 2048, %s30, [#allocation6], 128, 128, 8
    $region9: #{tpu_custom_call.1} parent=1 // pred_fallthru
      _
    // Predicated region
    $region10: #{tpu_custom_call.1} parent=1 // pred_check
      _
    $region11: #{tpu_custom_call.1} parent=1 // pred_check_branch
      %37 = sbr.rel (0) target = $region13
    $region12: #{tpu_custom_call.1} parent=1 // pred_region
      _
    $region13: #{tpu_custom_call.1} parent=1 // pred_fallthru
      _
    // Predicated region
    $region14: #{tpu_custom_call.1} parent=1 // pred_check
      _
    $region15: #{tpu_custom_call.1} parent=1 // pred_check_branch
      %39 = sbr.rel (0) target = $region17
    $region16: #{tpu_custom_call.1} parent=1 // pred_region
      %s41 = ssub.s32 2048, 2048
      %42 = vsyncadd [#allocation6], %s41
      %s43 = sshll.u32 [#allocation7], 4
      %s44 = int_to_ptr.vmem [resolvable:$true] %s43
      %49 = dma.hbm_to_vmem [thread:$0]  %s3, 2048, %s44, [#allocation6], 128, 128, 8
    $region17: #{tpu_custom_call.1} parent=1 // pred_fallthru
      _
    // Predicated region
    $region18: #{tpu_custom_call.1} parent=1 // pred_check
      _
    $region19: #{tpu_custom_call.1} parent=1 // pred_check_branch
      %51 = sbr.rel (0) target = $region21
    $region20: #{tpu_custom_call.1} parent=1 // pred_region
      %52 = dma.done [#allocation3], 256
    $region21: #{tpu_custom_call.1} parent=1 // pred_fallthru
      _
    // Predicated region
    $region22: #{tpu_custom_call.1} parent=1 // pred_check
      _
    $region23: #{tpu_custom_call.1} parent=1 // pred_check_branch
      %54 = sbr.rel (0) target = $region25
    $region24: #{tpu_custom_call.1} parent=1 // pred_region
      %55 = dma.done [#allocation6], 2048
    $region25: #{tpu_custom_call.1} parent=1 // pred_fallthru
      _
    // Predicated region
    $region26: #{tpu_custom_call.1} parent=1 // pred_check
      _
    $region27: #{tpu_custom_call.1} parent=1 // pred_check_branch
      %57 = sbr.rel (0) target = $region29
    $region28: #{tpu_custom_call.1} parent=1 // pred_region
      %58 = dma.done [#allocation6], 2048
    $region29: #{tpu_custom_call.1} parent=1 // pred_fallthru
      _
    %v59 = vld [vmem:[#allocation2] sm:$0xff]
    %v60 = vld [vmem:[#allocation2 + $0x8] sm:$0xff]
    %v61 = vld [vmem:[#allocation5] sm:$0xff]
    %v62 = vld [vmem:[#allocation5 + $0x8] sm:$0xff]
    %v63 = vld [vmem:[#allocation5 + $0x10] sm:$0xff]
    %v64 = vld [vmem:[#allocation5 + $0x18] sm:$0xff]
    %v65 = vld [vmem:[#allocation5 + $0x20] sm:$0xff]
    %v66 = vld [vmem:[#allocation5 + $0x28] sm:$0xff]
    %v67 = vld [vmem:[#allocation5 + $0x30] sm:$0xff]
    %v68 = vld [vmem:[#allocation5 + $0x38] sm:$0xff]
    %v69 = vld [vmem:[#allocation5 + $0x40] sm:$0xff]
    %v70 = vld [vmem:[#allocation5 + $0x48] sm:$0xff]
    %v71 = vld [vmem:[#allocation5 + $0x50] sm:$0xff]
    %v72 = vld [vmem:[#allocation5 + $0x58] sm:$0xff]
    %v73 = vld [vmem:[#allocation5 + $0x60] sm:$0xff]
    %v74 = vld [vmem:[#allocation5 + $0x68] sm:$0xff]
    %v75 = vld [vmem:[#allocation5 + $0x70] sm:$0xff]
    %v76 = vld [vmem:[#allocation5 + $0x78] sm:$0xff]
    %v77 = vld [vmem:[%s2] sm:$0x1]
    %v79 = vlaneseq
    %v80 = vshrl.u32 %v79, 7
    %v81 = vsub.s32 0, %v80
    %v82 = vrot.slane %v77, %v81
    %84 = vmatprep.subr.mxu0 0.0
    %85 = vmatpush1.msra.mxu0 %v61
    %86 = vmatprep.subr.mxu0 0.0
    %87 = vmatpush1.msra.mxu0 %v62
    %88 = vmatprep.subr.mxu0 0.0
    %89 = vmatpush1.msra.mxu0 %v63
    %90 = vmatprep.subr.mxu0 0.0
    %91 = vmatpush1.msra.mxu0 %v64
    %92 = vmatprep.subr.mxu0 0.0
    %93 = vmatpush1.msra.mxu0 %v65
    %94 = vmatprep.subr.mxu0 0.0
    %95 = vmatpush1.msra.mxu0 %v66
    %96 = vmatprep.subr.mxu0 0.0
    %97 = vmatpush1.msra.mxu0 %v67
    %98 = vmatprep.subr.mxu0 0.0
    %99 = vmatpush1.msra.mxu0 %v68
    %100 = vmatprep.subr.mxu0 0.0
    %101 = vmatpush1.msra.mxu0 %v69
    %102 = vmatprep.subr.mxu0 0.0
    %103 = vmatpush1.msra.mxu0 %v70
    %104 = vmatprep.subr.mxu0 0.0
    %105 = vmatpush1.msra.mxu0 %v71
    %106 = vmatprep.subr.mxu0 0.0
    %107 = vmatpush1.msra.mxu0 %v72
    %108 = vmatprep.subr.mxu0 0.0
    %109 = vmatpush1.msra.mxu0 %v73
    %110 = vmatprep.subr.mxu0 0.0
    %111 = vmatpush1.msra.mxu0 %v74
    %112 = vmatprep.subr.mxu0 0.0
    %113 = vmatpush1.msra.mxu0 %v75
    %114 = vmatprep.subr.mxu0 0.0
    %115 = vmatpush1.msra.mxu0 %v76
    %116 = vmatprep.subr.mxu0 0.0
    %117 = vmatpush1.msra.mxu0 0.0
    %118 = vmatprep.subr.mxu0 0.0
    %119 = vmatpush1.msra.mxu0 0.0
    %120 = vmatprep.subr.mxu0 0.0
    %121 = vmatpush1.msra.mxu0 0.0
    %122 = vmatprep.subr.mxu0 0.0
    %123 = vmatpush1.msra.mxu0 0.0
    %124 = vmatprep.subr.mxu0 0.0
    %125 = vmatpush1.msra.mxu0 0.0
    %126 = vmatprep.subr.mxu0 0.0
    %127 = vmatpush1.msra.mxu0 0.0
    %128 = vmatprep.subr.mxu0 0.0
    %129 = vmatpush1.msra.mxu0 0.0
    %130 = vmatprep.subr.mxu0 0.0
    %131 = vmatpush1.msra.mxu0 0.0
    %132 = vmatprep.subr.mxu0 0.0
    %133 = vmatpush1.msra.mxu0 0.0
    %134 = vmatprep.subr.mxu0 0.0
    %135 = vmatpush1.msra.mxu0 0.0
    %136 = vmatprep.subr.mxu0 0.0
    %137 = vmatpush1.msra.mxu0 0.0
    %138 = vmatprep.subr.mxu0 0.0
    %139 = vmatpush1.msra.mxu0 0.0
    %140 = vmatprep.subr.mxu0 0.0
    %141 = vmatpush1.msra.mxu0 0.0
    %142 = vmatprep.subr.mxu0 0.0
    %143 = vmatpush1.msra.mxu0 0.0
    %144 = vmatprep.subr.mxu0 0.0
    %145 = vmatpush1.msra.mxu0 0.0
    %146 = vmatprep.subr.mxu0 0.0
    %147 = vmatpush1.msra.mxu0 0.0
    %148 = vmatprep.mubr.f32.mxu0 0.0
    %149 = vmatmul.mubr.f32.gmra.mrb[0].mxu0 %v59
    %v150 = vpop.f32.mrb[0].mxu0
    %v151 = vadd.f32 %v82, %v150
    %v152 = vpop.f32.mrb[0].mxu0
    %153 = vmatprep.mubr.f32.mxu0 0.0
    %154 = vmatmul.mubr.f32.gmra.mrb[0].mxu0 %v60
    %v155 = vpop.f32.mrb[0].mxu0
    %v156 = vadd.f32 %v82, %v155
    %v157 = vpop.f32.mrb[0].mxu0
    %158 = vdwg.mxu0
    %v159 = vmax.f32 %v151, 0.0
    %v160 = vmax.f32 %v156, 0.0
    %v161 = vld [vmem:[#allocation7] sm:$0xff]
    %v162 = vld [vmem:[#allocation7 + $0x8] sm:$0xff]
    %v163 = vld [vmem:[#allocation7 + $0x10] sm:$0xff]
    %v164 = vld [vmem:[#allocation7 + $0x18] sm:$0xff]
    %v165 = vld [vmem:[#allocation7 + $0x20] sm:$0xff]
    %v166 = vld [vmem:[#allocation7 + $0x28] sm:$0xff]
    %v167 = vld [vmem:[#allocation7 + $0x30] sm:$0xff]
    %v168 = vld [vmem:[#allocation7 + $0x38] sm:$0xff]
    %v169 = vld [vmem:[#allocation7 + $0x40] sm:$0xff]
    %v170 = vld [vmem:[#allocation7 + $0x48] sm:$0xff]
    %v171 = vld [vmem:[#allocation7 + $0x50] sm:$0xff]
    %v172 = vld [vmem:[#allocation7 + $0x58] sm:$0xff]
    %v173 = vld [vmem:[#allocation7 + $0x60] sm:$0xff]
    %v174 = vld [vmem:[#allocation7 + $0x68] sm:$0xff]
    %v175 = vld [vmem:[#allocation7 + $0x70] sm:$0xff]
    %v176 = vld [vmem:[#allocation7 + $0x78] sm:$0xff]
    %177 = vmatprep.subr.mxu0 0.0
    %178 = vmatpush1.msra.mxu0 %v161
    %179 = vmatprep.subr.mxu0 0.0
    %180 = vmatpush1.msra.mxu0 %v162
    %181 = vmatprep.subr.mxu0 0.0
    %182 = vmatpush1.msra.mxu0 %v163
    %183 = vmatprep.subr.mxu0 0.0
    %184 = vmatpush1.msra.mxu0 %v164
    %185 = vmatprep.subr.mxu0 0.0
    %186 = vmatpush1.msra.mxu0 %v165
    %187 = vmatprep.subr.mxu0 0.0
    %188 = vmatpush1.msra.mxu0 %v166
    %189 = vmatprep.subr.mxu0 0.0
    %190 = vmatpush1.msra.mxu0 %v167
    %191 = vmatprep.subr.mxu0 0.0
    %192 = vmatpush1.msra.mxu0 %v168
    %193 = vmatprep.subr.mxu0 0.0
    %194 = vmatpush1.msra.mxu0 %v169
    %195 = vmatprep.subr.mxu0 0.0
    %196 = vmatpush1.msra.mxu0 %v170
    %197 = vmatprep.subr.mxu0 0.0
    %198 = vmatpush1.msra.mxu0 %v171
    %199 = vmatprep.subr.mxu0 0.0
    %200 = vmatpush1.msra.mxu0 %v172
    %201 = vmatprep.subr.mxu0 0.0
    %202 = vmatpush1.msra.mxu0 %v173
    %203 = vmatprep.subr.mxu0 0.0
    %204 = vmatpush1.msra.mxu0 %v174
    %205 = vmatprep.subr.mxu0 0.0
    %206 = vmatpush1.msra.mxu0 %v175
    %207 = vmatprep.subr.mxu0 0.0
    %208 = vmatpush1.msra.mxu0 %v176
    %209 = vmatprep.subr.mxu0 0.0
    %210 = vmatpush1.msra.mxu0 0.0
    %211 = vmatprep.subr.mxu0 0.0
    %212 = vmatpush1.msra.mxu0 0.0
    %213 = vmatprep.subr.mxu0 0.0
    %214 = vmatpush1.msra.mxu0 0.0
    %215 = vmatprep.subr.mxu0 0.0
    %216 = vmatpush1.msra.mxu0 0.0
    %217 = vmatprep.subr.mxu0 0.0
    %218 = vmatpush1.msra.mxu0 0.0
    %219 = vmatprep.subr.mxu0 0.0
    %220 = vmatpush1.msra.mxu0 0.0
    %221 = vmatprep.subr.mxu0 0.0
    %222 = vmatpush1.msra.mxu0 0.0
    %223 = vmatprep.subr.mxu0 0.0
    %224 = vmatpush1.msra.mxu0 0.0
    %225 = vmatprep.subr.mxu0 0.0
    %226 = vmatpush1.msra.mxu0 0.0
    %227 = vmatprep.subr.mxu0 0.0
    %228 = vmatpush1.msra.mxu0 0.0
    %229 = vmatprep.subr.mxu0 0.0
    %230 = vmatpush1.msra.mxu0 0.0
    %231 = vmatprep.subr.mxu0 0.0
    %232 = vmatpush1.msra.mxu0 0.0
    %233 = vmatprep.subr.mxu0 0.0
    %234 = vmatpush1.msra.mxu0 0.0
    %235 = vmatprep.subr.mxu0 0.0
    %236 = vmatpush1.msra.mxu0 0.0
    %237 = vmatprep.subr.mxu0 0.0
    %238 = vmatpush1.msra.mxu0 0.0
    %239 = vmatprep.subr.mxu0 0.0
    %240 = vmatpush1.msra.mxu0 0.0
    %241 = vmatprep.mubr.f32.mxu0 0.0
    %242 = vmatmul.mubr.f32.gmra.mrb[0].mxu0 %v159
    %v243 = vpop.f32.mrb[0].mxu0
    %v244 = vadd.f32 0.0, %v243
    %v245 = vpop.f32.mrb[0].mxu0
    %246 = vmatprep.mubr.f32.mxu0 0.0
    %247 = vmatmul.mubr.f32.gmra.mrb[0].mxu0 %v160
    %v248 = vpop.f32.mrb[0].mxu0
    %v249 = vadd.f32 0.0, %v248
    %v250 = vpop.f32.mrb[0].mxu0
    %251 = vdwg.mxu0
    %252 = vst [vmem:[#allocation8] sm:$0xff] %v244
    %253 = vst [vmem:[#allocation8 + $0x8] sm:$0xff] %v249
    // Predicated region
    $region30: #{tpu_custom_call.1} parent=1 // pred_check
      _
    $region31: #{tpu_custom_call.1} parent=1 // pred_check_branch
      %255 = sbr.rel (0) target = $region33
    $region32: #{tpu_custom_call.1} parent=1 // pred_region
      %s257 = ssub.s32 256, 256
      %258 = vsyncadd [#allocation4], %s257
      %s259 = sshll.u32 [#allocation8], 4
      %s260 = int_to_ptr.vmem [resolvable:$true] %s259
      %265 = dma.vmem_to_hbm [thread:$0]  %s260, 256, %s4, [#allocation4], 128, 128, 8
    $region33: #{tpu_custom_call.1} parent=1 // pred_fallthru
      _
    // Predicated region
    $region34: #{tpu_custom_call.1} parent=1 // pred_check
      _
    $region35: #{tpu_custom_call.1} parent=1 // pred_check_branch
      %267 = sbr.rel (0) target = $region37
    $region36: #{tpu_custom_call.1} parent=1 // pred_region
      %268 = dma.done [#allocation4], 256
    $region37: #{tpu_custom_call.1} parent=1 // pred_fallthru
      _
    %269 = vsyncpa [#allocation3], 1
    %270 = vsyncpa [#allocation6], 1
    %271 = vsyncpa [#allocation4], 1

// kernel: tpu_custom_call.1
$region0: #{tpu_custom_call.1}
  #allocation0 [shape = 'u32[]', space=smem, size = 0x4, offset = 0x4, fixed_abs, tag = 'smem constant byte address 0x4 - core index']
  #allocation1 [shape = 'u32[144,128]{1,0:T(1,128)}', space=vmem, size = 0x12000, scoped, tag = 'internal scratch']
  %s0 = inlined_call_operand.hbm [shape: f32[16,128], index: 0, kind: input, shape index: {}]
  %s1 = inlined_call_operand.hbm [shape: f32[128,128], index: 1, kind: input, shape index: {}]
  %s2 = inlined_call_operand.vmem [shape: f32[1,128], index: 2, kind: input, shape index: {}]
  %s3 = inlined_call_operand.hbm [shape: f32[128,128], index: 3, kind: input, shape index: {}]
  %s4 = inlined_call_operand.hbm [shape: f32[16,128], index: 4, kind: output, shape index: {}]
  %s5 = sld [smem:[#allocation0]]
  $region38: #{tpu_custom_call.1} parent=0
    _
  %s7 = ssub.s32 1, %s5
  %s8 = scalar_select 0, %s7, %s5
  $region1: #{tpu_custom_call.1} parent=0
    #allocation2 [shape = 'u8[8192]{0}', space=vmem, size = 0x2000, scoped, tag = 'input window, operand 0, single buffered']
    #allocation3 [shape = 's32[1]{0}', space=sflag, size = 0x4, scoped, tag = 'scoped memory for tpu_custom_call.1']
    #allocation4 [shape = 's32[1]{0}', space=sflag, size = 0x4, scoped, tag = 'scoped memory for tpu_custom_call.1']
    #allocation5 [shape = 'u8[65536]{0}', space=vmem, size = 0x10000, scoped, tag = 'input window, operand 1, single buffered']
    #allocation6 [shape = 's32[1]{0}', space=sflag, size = 0x4, scoped, tag = 'scoped memory for tpu_custom_call.1']
    #allocation7 [shape = 'u8[65536]{0}', space=vmem, size = 0x10000, scoped, tag = 'input window, operand 3, single buffered']
    #allocation8 [shape = 'u8[8192]{0}', space=vmem, size = 0x2000, scoped, tag = 'output window, operand 0, single buffered']
    %9 = vsyncpa [#allocation3], 0
    %10 = vsyncpa [#allocation6], 0
    %11 = vsyncpa [#allocation4], 0
    // Predicated region
    $region2: #{tpu_custom_call.1} parent=1 // pred_check
      _
    $region3: #{tpu_custom_call.1} parent=1 // pred_check_branch
      %13 = sbr.rel (0) target = $region5
    $region4: #{tpu_custom_call.1} parent=1 // pred_region
      %s15 = ssub.s32 256, 256
      %16 = vsyncadd [#allocation3], %s15
      %s17 = sshll.u32 [#allocation2], 4
      %s18 = int_to_ptr.vmem [resolvable:$true] %s17
      %23 = dma.hbm_to_vmem [thread:$0]  %s0, 256, %s18, [#allocation3], 128, 128, 8
    $region5: #{tpu_custom_call.1} parent=1 // pred_fallthru
      _
    // Predicated region
    $region6: #{tpu_custom_call.1} parent=1 // pred_check
      _
    $region7: #{tpu_custom_call.1} parent=1 // pred_check_branch
      %25 = sbr.rel (0) target = $region9
    $region8: #{tpu_custom_call.1} parent=1 // pred_region
      %s27 = ssub.s32 2048, 2048
      %28 = vsyncadd [#allocation6], %s27
      %s29 = sshll.u32 [#allocation5], 4
      %s30 = int_to_ptr.vmem [resolvable:$true] %s29
      %35 = dma.hbm_to_vmem [thread:$0]  %s1, 2048, %s30, [#allocation6], 128, 128, 8
    $region9: #{tpu_custom_call.1} parent=1 // pred_fallthru
      _
    // Predicated region
    $region10: #{tpu_custom_call.1} parent=1 // pred_check
      _
    $region11: #{tpu_custom_call.1} parent=1 // pred_check_branch
      %37 = sbr.rel (0) target = $region13
    $region12: #{tpu_custom_call.1} parent=1 // pred_region
      _
    $region13: #{tpu_custom_call.1} parent=1 // pred_fallthru
      _
    // Predicated region
    $region14: #{tpu_custom_call.1} parent=1 // pred_check
      _
    $region15: #{tpu_custom_call.1} parent=1 // pred_check_branch
      %39 = sbr.rel (0) target = $region17
    $region16: #{tpu_custom_call.1} parent=1 // pred_region
      %s41 = ssub.s32 2048, 2048
      %42 = vsyncadd [#allocation6], %s41
      %s43 = sshll.u32 [#allocation7], 4
      %s44 = int_to_ptr.vmem [resolvable:$true] %s43
      %49 = dma.hbm_to_vmem [thread:$0]  %s3, 2048, %s44, [#allocation6], 128, 128, 8
    $region17: #{tpu_custom_call.1} parent=1 // pred_fallthru
      _
    // Predicated region
    $region18: #{tpu_custom_call.1} parent=1 // pred_check
      _
    $region19: #{tpu_custom_call.1} parent=1 // pred_check_branch
      %51 = sbr.rel (0) target = $region21
    $region20: #{tpu_custom_call.1} parent=1 // pred_region
      %52 = dma.done [#allocation3], 256
    $region21: #{tpu_custom_call.1} parent=1 // pred_fallthru
      _
    // Predicated region
    $region22: #{tpu_custom_call.1} parent=1 // pred_check
      _
    $region23: #{tpu_custom_call.1} parent=1 // pred_check_branch
      %54 = sbr.rel (0) target = $region25
    $region24: #{tpu_custom_call.1} parent=1 // pred_region
      %55 = dma.done [#allocation6], 2048
    $region25: #{tpu_custom_call.1} parent=1 // pred_fallthru
      _
    // Predicated region
    $region26: #{tpu_custom_call.1} parent=1 // pred_check
      _
    $region27: #{tpu_custom_call.1} parent=1 // pred_check_branch
      %57 = sbr.rel (0) target = $region29
    $region28: #{tpu_custom_call.1} parent=1 // pred_region
      %58 = dma.done [#allocation6], 2048
    $region29: #{tpu_custom_call.1} parent=1 // pred_fallthru
      _
    %v59 = vld [vmem:[#allocation2] sm:$0xff]
    %v60 = vld [vmem:[#allocation2 + $0x8] sm:$0xff]
    %v61 = vld [vmem:[#allocation5] sm:$0xff]
    %v62 = vld [vmem:[#allocation5 + $0x8] sm:$0xff]
    %v63 = vld [vmem:[#allocation5 + $0x10] sm:$0xff]
    %v64 = vld [vmem:[#allocation5 + $0x18] sm:$0xff]
    %v65 = vld [vmem:[#allocation5 + $0x20] sm:$0xff]
    %v66 = vld [vmem:[#allocation5 + $0x28] sm:$0xff]
    %v67 = vld [vmem:[#allocation5 + $0x30] sm:$0xff]
    %v68 = vld [vmem:[#allocation5 + $0x38] sm:$0xff]
    %v69 = vld [vmem:[#allocation5 + $0x40] sm:$0xff]
    %v70 = vld [vmem:[#allocation5 + $0x48] sm:$0xff]
    %v71 = vld [vmem:[#allocation5 + $0x50] sm:$0xff]
    %v72 = vld [vmem:[#allocation5 + $0x58] sm:$0xff]
    %v73 = vld [vmem:[#allocation5 + $0x60] sm:$0xff]
    %v74 = vld [vmem:[#allocation5 + $0x68] sm:$0xff]
    %v75 = vld [vmem:[#allocation5 + $0x70] sm:$0xff]
    %v76 = vld [vmem:[#allocation5 + $0x78] sm:$0xff]
    %v77 = vld [vmem:[%s2] sm:$0x1]
    %v79 = vlaneseq
    %v80 = vshrl.u32 %v79, 7
    %v81 = vsub.s32 0, %v80
    %v82 = vrot.slane %v77, %v81
    %84 = vmatprep.subr.mxu0 0.0
    %85 = vmatpush1.msra.mxu0 %v61
    %86 = vmatprep.subr.mxu0 0.0
    %87 = vmatpush1.msra.mxu0 %v62
    %88 = vmatprep.subr.mxu0 0.0
    %89 = vmatpush1.msra.mxu0 %v63
    %90 = vmatprep.subr.mxu0 0.0
    %91 = vmatpush1.msra.mxu0 %v64
    %92 = vmatprep.subr.mxu0 0.0
    %93 = vmatpush1.msra.mxu0 %v65
    %94 = vmatprep.subr.mxu0 0.0
    %95 = vmatpush1.msra.mxu0 %v66
    %96 = vmatprep.subr.mxu0 0.0
    %97 = vmatpush1.msra.mxu0 %v67
    %98 = vmatprep.subr.mxu0 0.0
    %99 = vmatpush1.msra.mxu0 %v68
    %100 = vmatprep.subr.mxu0 0.0
    %101 = vmatpush1.msra.mxu0 %v69
    %102 = vmatprep.subr.mxu0 0.0
    %103 = vmatpush1.msra.mxu0 %v70
    %104 = vmatprep.subr.mxu0 0.0
    %105 = vmatpush1.msra.mxu0 %v71
    %106 = vmatprep.subr.mxu0 0.0
    %107 = vmatpush1.msra.mxu0 %v72
    %108 = vmatprep.subr.mxu0 0.0
    %109 = vmatpush1.msra.mxu0 %v73
    %110 = vmatprep.subr.mxu0 0.0
    %111 = vmatpush1.msra.mxu0 %v74
    %112 = vmatprep.subr.mxu0 0.0
    %113 = vmatpush1.msra.mxu0 %v75
    %114 = vmatprep.subr.mxu0 0.0
    %115 = vmatpush1.msra.mxu0 %v76
    %116 = vmatprep.subr.mxu0 0.0
    %117 = vmatpush1.msra.mxu0 0.0
    %118 = vmatprep.subr.mxu0 0.0
    %119 = vmatpush1.msra.mxu0 0.0
    %120 = vmatprep.subr.mxu0 0.0
    %121 = vmatpush1.msra.mxu0 0.0
    %122 = vmatprep.subr.mxu0 0.0
    %123 = vmatpush1.msra.mxu0 0.0
    %124 = vmatprep.subr.mxu0 0.0
    %125 = vmatpush1.msra.mxu0 0.0
    %126 = vmatprep.subr.mxu0 0.0
    %127 = vmatpush1.msra.mxu0 0.0
    %128 = vmatprep.subr.mxu0 0.0
    %129 = vmatpush1.msra.mxu0 0.0
    %130 = vmatprep.subr.mxu0 0.0
    %131 = vmatpush1.msra.mxu0 0.0
    %132 = vmatprep.subr.mxu0 0.0
    %133 = vmatpush1.msra.mxu0 0.0
    %134 = vmatprep.subr.mxu0 0.0
    %135 = vmatpush1.msra.mxu0 0.0
    %136 = vmatprep.subr.mxu0 0.0
    %137 = vmatpush1.msra.mxu0 0.0
    %138 = vmatprep.subr.mxu0 0.0
    %139 = vmatpush1.msra.mxu0 0.0
    %140 = vmatprep.subr.mxu0 0.0
    %141 = vmatpush1.msra.mxu0 0.0
    %142 = vmatprep.subr.mxu0 0.0
    %143 = vmatpush1.msra.mxu0 0.0
    %144 = vmatprep.subr.mxu0 0.0
    %145 = vmatpush1.msra.mxu0 0.0
    %146 = vmatprep.subr.mxu0 0.0
    %147 = vmatpush1.msra.mxu0 0.0
    %148 = vmatprep.mubr.f32.mxu0 0.0
    %149 = vmatmul.mubr.f32.gmra.mrb[0].mxu0 %v59
    %v150 = vpop.f32.mrb[0].mxu0
    %v151 = vadd.f32 %v82, %v150
    %v152 = vpop.f32.mrb[0].mxu0
    %153 = vmatprep.mubr.f32.mxu0 0.0
    %154 = vmatmul.mubr.f32.gmra.mrb[0].mxu0 %v60
    %v155 = vpop.f32.mrb[0].mxu0
    %v156 = vadd.f32 %v82, %v155
    %v157 = vpop.f32.mrb[0].mxu0
    %158 = vdwg.mxu0
    %v159 = vmax.f32 %v151, 0.0
    %v160 = vmax.f32 %v156, 0.0
    %v161 = vld [vmem:[#allocation7] sm:$0xff]
    %v162 = vld [vmem:[#allocation7 + $0x8] sm:$0xff]
    %v163 = vld [vmem:[#allocation7 + $0x10] sm:$0xff]
    %v164 = vld [vmem:[#allocation7 + $0x18] sm:$0xff]
    %v165 = vld [vmem:[#allocation7 + $0x20] sm:$0xff]
    %v166 = vld [vmem:[#allocation7 + $0x28] sm:$0xff]
    %v167 = vld [vmem:[#allocation7 + $0x30] sm:$0xff]
    %v168 = vld [vmem:[#allocation7 + $0x38] sm:$0xff]
    %v169 = vld [vmem:[#allocation7 + $0x40] sm:$0xff]
    %v170 = vld [vmem:[#allocation7 + $0x48] sm:$0xff]
    %v171 = vld [vmem:[#allocation7 + $0x50] sm:$0xff]
    %v172 = vld [vmem:[#allocation7 + $0x58] sm:$0xff]
    %v173 = vld [vmem:[#allocation7 + $0x60] sm:$0xff]
    %v174 = vld [vmem:[#allocation7 + $0x68] sm:$0xff]
    %v175 = vld [vmem:[#allocation7 + $0x70] sm:$0xff]
    %v176 = vld [vmem:[#allocation7 + $0x78] sm:$0xff]
    %177 = vmatprep.subr.mxu0 0.0
    %178 = vmatpush1.msra.mxu0 %v161
    %179 = vmatprep.subr.mxu0 0.0
    %180 = vmatpush1.msra.mxu0 %v162
    %181 = vmatprep.subr.mxu0 0.0
    %182 = vmatpush1.msra.mxu0 %v163
    %183 = vmatprep.subr.mxu0 0.0
    %184 = vmatpush1.msra.mxu0 %v164
    %185 = vmatprep.subr.mxu0 0.0
    %186 = vmatpush1.msra.mxu0 %v165
    %187 = vmatprep.subr.mxu0 0.0
    %188 = vmatpush1.msra.mxu0 %v166
    %189 = vmatprep.subr.mxu0 0.0
    %190 = vmatpush1.msra.mxu0 %v167
    %191 = vmatprep.subr.mxu0 0.0
    %192 = vmatpush1.msra.mxu0 %v168
    %193 = vmatprep.subr.mxu0 0.0
    %194 = vmatpush1.msra.mxu0 %v169
    %195 = vmatprep.subr.mxu0 0.0
    %196 = vmatpush1.msra.mxu0 %v170
    %197 = vmatprep.subr.mxu0 0.0
    %198 = vmatpush1.msra.mxu0 %v171
    %199 = vmatprep.subr.mxu0 0.0
    %200 = vmatpush1.msra.mxu0 %v172
    %201 = vmatprep.subr.mxu0 0.0
    %202 = vmatpush1.msra.mxu0 %v173
    %203 = vmatprep.subr.mxu0 0.0
    %204 = vmatpush1.msra.mxu0 %v174
    %205 = vmatprep.subr.mxu0 0.0
    %206 = vmatpush1.msra.mxu0 %v175
    %207 = vmatprep.subr.mxu0 0.0
    %208 = vmatpush1.msra.mxu0 %v176
    %209 = vmatprep.subr.mxu0 0.0
    %210 = vmatpush1.msra.mxu0 0.0
    %211 = vmatprep.subr.mxu0 0.0
    %212 = vmatpush1.msra.mxu0 0.0
    %213 = vmatprep.subr.mxu0 0.0
    %214 = vmatpush1.msra.mxu0 0.0
    %215 = vmatprep.subr.mxu0 0.0
    %216 = vmatpush1.msra.mxu0 0.0
    %217 = vmatprep.subr.mxu0 0.0
    %218 = vmatpush1.msra.mxu0 0.0
    %219 = vmatprep.subr.mxu0 0.0
    %220 = vmatpush1.msra.mxu0 0.0
    %221 = vmatprep.subr.mxu0 0.0
    %222 = vmatpush1.msra.mxu0 0.0
    %223 = vmatprep.subr.mxu0 0.0
    %224 = vmatpush1.msra.mxu0 0.0
    %225 = vmatprep.subr.mxu0 0.0
    %226 = vmatpush1.msra.mxu0 0.0
    %227 = vmatprep.subr.mxu0 0.0
    %228 = vmatpush1.msra.mxu0 0.0
    %229 = vmatprep.subr.mxu0 0.0
    %230 = vmatpush1.msra.mxu0 0.0
    %231 = vmatprep.subr.mxu0 0.0
    %232 = vmatpush1.msra.mxu0 0.0
    %233 = vmatprep.subr.mxu0 0.0
    %234 = vmatpush1.msra.mxu0 0.0
    %235 = vmatprep.subr.mxu0 0.0
    %236 = vmatpush1.msra.mxu0 0.0
    %237 = vmatprep.subr.mxu0 0.0
    %238 = vmatpush1.msra.mxu0 0.0
    %239 = vmatprep.subr.mxu0 0.0
    %240 = vmatpush1.msra.mxu0 0.0
    %241 = vmatprep.mubr.f32.mxu0 0.0
    %242 = vmatmul.mubr.f32.gmra.mrb[0].mxu0 %v159
    %v243 = vpop.f32.mrb[0].mxu0
    %v244 = vadd.f32 0.0, %v243
    %v245 = vpop.f32.mrb[0].mxu0
    %246 = vmatprep.mubr.f32.mxu0 0.0
    %247 = vmatmul.mubr.f32.gmra.mrb[0].mxu0 %v160
    %v248 = vpop.f32.mrb[0].mxu0
    %v249 = vadd.f32 0.0, %v248
    %v250 = vpop.f32.mrb[0].mxu0
    %251 = vdwg.mxu0
    %252 = vst [vmem:[#allocation8] sm:$0xff] %v244
    %253 = vst [vmem:[#allocation8 + $0x8] sm:$0xff] %v249
    // Predicated region
    $region30: #{tpu_custom_call.1} parent=1 // pred_check
      _
    $region31: #{tpu_custom_call.1} parent=1 // pred_check_branch
      %255 = sbr.rel (0) target = $region33
    $region32: #{tpu_custom_call.1} parent=1 // pred_region
      %s257 = ssub.s32 256, 256
      %258 = vsyncadd [#allocation4], %s257
      %s259 = sshll.u32 [#allocation8], 4
      %s260 = int_to_ptr.vmem [resolvable:$true] %s259
      %265 = dma.vmem_to_hbm [thread:$0]  %s260, 256, %s4, [#allocation4], 128, 128, 8
    $region33: #{tpu_custom_call.1} parent=1 // pred_fallthru
      _
    // Predicated region
    $region34: #{tpu_custom_call.1} parent=1 // pred_check
      _
    $region35: #{tpu_custom_call.1} parent=1 // pred_check_branch
      %267 = sbr.rel (0) target = $region37
    $region36: #{tpu_custom_call.1} parent=1 // pred_region
      %268 = dma.done [#allocation4], 256
    $region37: #{tpu_custom_call.1} parent=1 // pred_fallthru
      _
    %269 = vsyncpa [#allocation3], 1
    %270 = vsyncpa [#allocation6], 1
    %271 = vsyncpa [#allocation4], 1

</llo_original>
